<compile_context>
chip_gen: v7x
topology: tpu7x:2x2x1
jax: 0.10.0
libtpu: 0.0.40
codegen_flags: <defaults>
</compile_context>

<pallas_src>
import functools

import jax
import jax.numpy as jnp
from jax.experimental import pallas as pl
from jax.experimental.pallas import tpu as pltpu


def _round_up(n, m):
    return ((n + m - 1) // m) * m


def _mlp_kernel(x_ref, w1_ref, b1_ref, w2_ref, b2_ref, w3_ref, b3_ref,
                w4_ref, b4_ref, o_ref, *, output_activation):
    """Fused 4-layer MLP on one (TM, in_dim) batch tile.

    MXU inputs are bf16; accumulation / bias / ReLU / softmax run in f32.
    The head is lane-padded to 128 columns so the output store is unmasked.
    """
    f32 = jnp.float32
    bf16 = jnp.bfloat16

    x = x_ref[...]                                               # bf16 (TM, in)

    h = jnp.dot(x, w1_ref[...], preferred_element_type=f32) + b1_ref[...]
    h = jnp.maximum(h, 0.0).astype(bf16)                         # ReLU

    h = jnp.dot(h, w2_ref[...], preferred_element_type=f32) + b2_ref[...]
    h = jnp.maximum(h, 0.0).astype(bf16)                         # ReLU

    h = jnp.dot(h, w3_ref[...], preferred_element_type=f32) + b3_ref[...]
    h = jnp.maximum(h, 0.0).astype(bf16)                         # ReLU

    out = jnp.dot(h, w4_ref[...], preferred_element_type=f32) + b4_ref[...]

    if output_activation == "softmax":
        # Padded logit columns carry a -1e30 bias -> exp underflows to 0, so
        # the max/sum over the 128-wide row equal the real-column max/sum.
        # Exact normalization (these probabilities may be sampled downstream).
        out = out - jnp.max(out, axis=-1, keepdims=True)
        e = jnp.exp(out)
        out = e / jnp.sum(e, axis=-1, keepdims=True)
    elif output_activation in ("identity", None):
        pass  # no output activation
    else:
        # TODO(synk): the PyTorch module accepts an arbitrary callable
        # `activation`; only {"softmax", "identity"/None} are supported here.
        raise ValueError(f"unknown output_activation: {output_activation}")

    o_ref[...] = out.astype(o_ref.dtype)


def neural_net_forward(x, params, output_activation="softmax", block_rows=1024):
    """Runs the full MLP forward, tiled over the batch dimension."""
    (w1, b1), (w2, b2), (w3, b3), (w4, b4) = params
    batch, in_dim = x.shape
    out_dim = w4.shape[1]

    # --- Lane-dense head: pad the output layer to a 128-wide slab. ---------
    lane = 128
    out_pad = _round_up(max(out_dim, 1), lane)
    pad_cols = out_pad - out_dim
    pad_bias = -1e30 if output_activation == "softmax" else 0.0
    w4p = jnp.pad(w4, ((0, 0), (0, pad_cols)))
    b4p = jnp.pad(b4, ((0, 0), (0, pad_cols)), constant_values=pad_bias)

    # --- bf16 MXU inputs (weights once, x once); biases stay f32. ----------
    xb = x.astype(jnp.bfloat16)
    w1b = w1.astype(jnp.bfloat16)
    w2b = w2.astype(jnp.bfloat16)
    w3b = w3.astype(jnp.bfloat16)
    w4b = w4p.astype(jnp.bfloat16)

    # --- Batch tiling. ------------------------------------------------------
    # Small batches round up to a sublane multiple (8); large batches use
    # block_rows-row tiles. Keep >=2 grid steps when the batch allows it so
    # ("parallel",) can shard across both v7x TensorCores.
    padded_min = _round_up(batch, 8)
    tm = min(block_rows, padded_min)
    if padded_min >= 16:
        tm = min(tm, _round_up(pl.cdiv(padded_min, 2), 8))
    padded = _round_up(padded_min, tm)
    if padded != batch:
        xb = jnp.pad(xb, ((0, padded - batch), (0, 0)))

    grid = (padded // tm,)

    kernel = functools.partial(_mlp_kernel, output_activation=output_activation)

    # Weights / biases: full-array blocks with a constant index_map -> DMA'd
    # once and kept resident in VMEM across all grid steps.
    resident = lambda a: pl.BlockSpec(a.shape, lambda i: (0, 0))
    weights = (w1b, b1, w2b, b2, w3b, b3, w4b, b4p)

    in_specs = [pl.BlockSpec((tm, in_dim), lambda i: (i, 0))]
    in_specs += [resident(a) for a in weights]

    out = pl.pallas_call(
        kernel,
        out_shape=jax.ShapeDtypeStruct((padded, out_pad), jnp.float32),
        grid=grid,
        in_specs=in_specs,
        out_specs=pl.BlockSpec((tm, out_pad), lambda i: (i, 0)),
        compiler_params=pltpu.CompilerParams(
            dimension_semantics=("parallel",)),
    )(xb, *weights)

    return out[:batch, :out_dim]


def init_params(key, input_size, output_size, layers=(32, 32, 16)):
    """Deterministic parameter init mirroring the PyTorch module.

    Weights: xavier normal, std = sqrt(2 / (fan_in + fan_out)).
    Biases:  PyTorch Linear default, uniform(-1/sqrt(fan_in), 1/sqrt(fan_in)).
    Weights are stored as (in_features, out_features).
    """
    dims = [input_size, layers[0], layers[1], layers[2], output_size]
    params = []
    for i in range(4):
        fan_in, fan_out = dims[i], dims[i + 1]
        key, kw, kb = jax.random.split(key, 3)
        std = (2.0 / (fan_in + fan_out)) ** 0.5
        w = std * jax.random.normal(kw, (fan_in, fan_out), dtype=jnp.float32)
        bound = 1.0 / (fan_in ** 0.5)
        b = jax.random.uniform(kb, (1, fan_out), dtype=jnp.float32,
                               minval=-bound, maxval=bound)
        params.append((w, b))
    return params


def _ref_forward(x, params, output_activation="softmax"):
    h = x
    for (w, b) in params[:3]:
        h = jnp.maximum(h @ w + b, 0.0)
    w4, b4 = params[3]
    logits = h @ w4 + b4
    if output_activation == "softmax":
        return jax.nn.softmax(logits, axis=-1)
    return logits


if __name__ == "__main__":
    # Small A2C-style policy network: 16-dim state -> 4 actions.
    input_size, output_size = 16, 4

    key = jax.random.PRNGKey(0)
    key, kx1, kx2 = jax.random.split(key, 3)
    params = init_params(key, input_size, output_size)

    # bf16 matmul inputs vs. f32 reference -> loose (~1e-2) tolerances.
    TOL = dict(atol=3e-2, rtol=3e-2)

    # Case 1: tiny batch (single grid step, TM rounded up to sublane multiple).
    x_small = jax.random.normal(kx1, (8, input_size), dtype=jnp.float32)
    out_small = jax.block_until_ready(
        neural_net_forward(x_small, params, output_activation="softmax"))
    ref_small = _ref_forward(x_small, params)
    assert out_small.shape == (8, output_size)
    assert jnp.allclose(out_small, ref_small, **TOL), \
        "mismatch vs reference (small batch)"

    # Case 2: non-multiple batch exercising the multi-step grid + padding path
    # (2 grid steps -> both TensorCores on v7x).
    x_big = jax.random.normal(kx2, (300, input_size), dtype=jnp.float32)
    out_big = jax.block_until_ready(
        neural_net_forward(x_big, params, output_activation="softmax"))
    ref_big = _ref_forward(x_big, params)
    assert out_big.shape == (300, output_size)
    assert jnp.allclose(out_big, ref_big, **TOL), \
        "mismatch vs reference (large batch)"
    # softmax rows sum to 1 (exact normalization in-kernel)
    assert jnp.allclose(out_big.sum(-1), 1.0, atol=1e-5)

    print("KERNEL_OK")
</pallas_src>

<mosaic_0001>
module attributes {stable_mosaic.version = 11 : i64} {
  func.func @_mlp_kernel(%arg0: i32, %arg1: memref<8x16xbf16, #tpu.memory_space<vmem>>, %arg2: memref<16x32xbf16, #tpu.memory_space<vmem>>, %arg3: memref<1x32xf32, #tpu.memory_space<vmem>>, %arg4: memref<32x32xbf16, #tpu.memory_space<vmem>>, %arg5: memref<1x32xf32, #tpu.memory_space<vmem>>, %arg6: memref<32x16xbf16, #tpu.memory_space<vmem>>, %arg7: memref<1x16xf32, #tpu.memory_space<vmem>>, %arg8: memref<16x128xbf16, #tpu.memory_space<vmem>>, %arg9: memref<1x128xf32, #tpu.memory_space<vmem>>, %arg10: memref<8x128xf32, #tpu.memory_space<vmem>>) attributes {dimension_semantics = [#tpu.dimension_semantics<parallel>], iteration_bounds = array<i64: 1>, scalar_prefetch = 0 : i64, scratch_operands = 0 : i64, tpu.core_type = #tpu.core_type<tc>, window_params = [{transform_indices = @transform_0, window_bounds = array<i64: 8, 16>}, {pipeline_mode = #tpu.pipeline_mode<synchronous>, transform_indices = @transform_1, window_bounds = array<i64: 16, 32>}, {pipeline_mode = #tpu.pipeline_mode<synchronous>, transform_indices = @transform_2, window_bounds = array<i64: 1, 32>}, {pipeline_mode = #tpu.pipeline_mode<synchronous>, transform_indices = @transform_3, window_bounds = array<i64: 32, 32>}, {pipeline_mode = #tpu.pipeline_mode<synchronous>, transform_indices = @transform_4, window_bounds = array<i64: 1, 32>}, {pipeline_mode = #tpu.pipeline_mode<synchronous>, transform_indices = @transform_5, window_bounds = array<i64: 32, 16>}, {pipeline_mode = #tpu.pipeline_mode<synchronous>, transform_indices = @transform_6, window_bounds = array<i64: 1, 16>}, {pipeline_mode = #tpu.pipeline_mode<synchronous>, transform_indices = @transform_7, window_bounds = array<i64: 16, 128>}, {pipeline_mode = #tpu.pipeline_mode<synchronous>, transform_indices = @transform_8, window_bounds = array<i64: 1, 128>}, {transform_indices = @transform_9, window_bounds = array<i64: 8, 128>}]} {
    %c0 = arith.constant 0 : index
    %c0_0 = arith.constant 0 : index
    %0 = vector.load %arg1[%c0, %c0_0] : memref<8x16xbf16, #tpu.memory_space<vmem>>, vector<8x16xbf16>
    %c0_1 = arith.constant 0 : index
    %c0_2 = arith.constant 0 : index
    %1 = vector.load %arg2[%c0_1, %c0_2] : memref<16x32xbf16, #tpu.memory_space<vmem>>, vector<16x32xbf16>
    %cst = arith.constant dense<0.000000e+00> : vector<8x32xf32>
    %2 = tpu.matmul %0, %1, %cst {dimension_numbers = #tpu.dot_dimension_numbers<[1], [0], [0], [1], [0, 0, 1, 1], [], []>} : vector<8x16xbf16>, vector<16x32xbf16>, vector<8x32xf32> -> vector<8x32xf32>
    %c0_3 = arith.constant 0 : index
    %c0_4 = arith.constant 0 : index
    %3 = vector.load %arg3[%c0_3, %c0_4] : memref<1x32xf32, #tpu.memory_space<vmem>>, vector<1x32xf32>
    %4 = vector.broadcast %3 : vector<1x32xf32> to vector<8x32xf32>
    %5 = arith.addf %2, %4 : vector<8x32xf32>
    %cst_5 = arith.constant 0.000000e+00 : f32
    %6 = vector.broadcast %cst_5 : f32 to vector<8x32xf32>
    %7 = arith.maximumf %5, %6 : vector<8x32xf32>
    %8 = arith.truncf %7 : vector<8x32xf32> to vector<8x32xbf16>
    %c0_6 = arith.constant 0 : index
    %c0_7 = arith.constant 0 : index
    %9 = vector.load %arg4[%c0_6, %c0_7] : memref<32x32xbf16, #tpu.memory_space<vmem>>, vector<32x32xbf16>
    %cst_8 = arith.constant dense<0.000000e+00> : vector<8x32xf32>
    %10 = tpu.matmul %8, %9, %cst_8 {dimension_numbers = #tpu.dot_dimension_numbers<[1], [0], [0], [1], [0, 0, 1, 1], [], []>} : vector<8x32xbf16>, vector<32x32xbf16>, vector<8x32xf32> -> vector<8x32xf32>
    %c0_9 = arith.constant 0 : index
    %c0_10 = arith.constant 0 : index
    %11 = vector.load %arg5[%c0_9, %c0_10] : memref<1x32xf32, #tpu.memory_space<vmem>>, vector<1x32xf32>
    %12 = vector.broadcast %11 : vector<1x32xf32> to vector<8x32xf32>
    %13 = arith.addf %10, %12 : vector<8x32xf32>
    %cst_11 = arith.constant 0.000000e+00 : f32
    %14 = vector.broadcast %cst_11 : f32 to vector<8x32xf32>
    %15 = arith.maximumf %13, %14 : vector<8x32xf32>
    %16 = arith.truncf %15 : vector<8x32xf32> to vector<8x32xbf16>
    %c0_12 = arith.constant 0 : index
    %c0_13 = arith.constant 0 : index
    %17 = vector.load %arg6[%c0_12, %c0_13] : memref<32x16xbf16, #tpu.memory_space<vmem>>, vector<32x16xbf16>
    %cst_14 = arith.constant dense<0.000000e+00> : vector<8x16xf32>
    %18 = tpu.matmul %16, %17, %cst_14 {dimension_numbers = #tpu.dot_dimension_numbers<[1], [0], [0], [1], [0, 0, 1, 1], [], []>} : vector<8x32xbf16>, vector<32x16xbf16>, vector<8x16xf32> -> vector<8x16xf32>
    %c0_15 = arith.constant 0 : index
    %c0_16 = arith.constant 0 : index
    %19 = vector.load %arg7[%c0_15, %c0_16] : memref<1x16xf32, #tpu.memory_space<vmem>>, vector<1x16xf32>
    %20 = vector.broadcast %19 : vector<1x16xf32> to vector<8x16xf32>
    %21 = arith.addf %18, %20 : vector<8x16xf32>
    %cst_17 = arith.constant 0.000000e+00 : f32
    %22 = vector.broadcast %cst_17 : f32 to vector<8x16xf32>
    %23 = arith.maximumf %21, %22 : vector<8x16xf32>
    %24 = arith.truncf %23 : vector<8x16xf32> to vector<8x16xbf16>
    %c0_18 = arith.constant 0 : index
    %c0_19 = arith.constant 0 : index
    %25 = vector.load %arg8[%c0_18, %c0_19] : memref<16x128xbf16, #tpu.memory_space<vmem>>, vector<16x128xbf16>
    %cst_20 = arith.constant dense<0.000000e+00> : vector<8x128xf32>
    %26 = tpu.matmul %24, %25, %cst_20 {dimension_numbers = #tpu.dot_dimension_numbers<[1], [0], [0], [1], [0, 0, 1, 1], [], []>} : vector<8x16xbf16>, vector<16x128xbf16>, vector<8x128xf32> -> vector<8x128xf32>
    %c0_21 = arith.constant 0 : index
    %c0_22 = arith.constant 0 : index
    %27 = vector.load %arg9[%c0_21, %c0_22] : memref<1x128xf32, #tpu.memory_space<vmem>>, vector<1x128xf32>
    %28 = vector.broadcast %27 : vector<1x128xf32> to vector<8x128xf32>
    %29 = arith.addf %26, %28 : vector<8x128xf32>
    %cst_23 = arith.constant dense<0xFF800000> : vector<8xf32>
    %30 = vector.multi_reduction <maximumf>, %29, %cst_23 [1] : vector<8x128xf32> to vector<8xf32>
    %31 = vector.shape_cast %30 : vector<8xf32> to vector<8x1xf32>
    %32 = vector.broadcast %31 : vector<8x1xf32> to vector<8x128xf32>
    %33 = arith.subf %29, %32 : vector<8x128xf32>
    %34 = math.exp %33 : vector<8x128xf32>
    %cst_24 = arith.constant dense<0.000000e+00> : vector<8xf32>
    %35 = vector.multi_reduction <add>, %34, %cst_24 [1] : vector<8x128xf32> to vector<8xf32>
    %36 = vector.shape_cast %35 : vector<8xf32> to vector<8x1xf32>
    %37 = vector.broadcast %36 : vector<8x1xf32> to vector<8x128xf32>
    %38 = arith.divf %34, %37 : vector<8x128xf32>
    %c0_25 = arith.constant 0 : index
    %c0_26 = arith.constant 0 : index
    %39 = vector.load %arg10[%c0_25, %c0_26] : memref<8x128xf32, #tpu.memory_space<vmem>>, vector<8x128xf32>
    tpu.vector_store %arg10[%c0_25, %c0_26], %38 {strides = array<i32>} : memref<8x128xf32, #tpu.memory_space<vmem>>, vector<8x128xf32>,
    return
  }
  func.func @transform_0(%arg0: i32) -> (i32, i32) {
    %c0_i32 = arith.constant 0 : i32
    %c0_i32_0 = arith.constant 0 : i32
    return %arg0, %c0_i32 : i32, i32
  }
  func.func @transform_1(%arg0: i32) -> (i32, i32) {
    %c0_i32 = arith.constant 0 : i32
    %c0_i32_0 = arith.constant 0 : i32
    %c0_i32_1 = arith.constant 0 : i32
    return %c0_i32, %c0_i32_0 : i32, i32
  }
  func.func @transform_2(%arg0: i32) -> (i32, i32) {
    %c0_i32 = arith.constant 0 : i32
    %c0_i32_0 = arith.constant 0 : i32
    %c0_i32_1 = arith.constant 0 : i32
    return %c0_i32, %c0_i32_0 : i32, i32
  }
  func.func @transform_3(%arg0: i32) -> (i32, i32) {
    %c0_i32 = arith.constant 0 : i32
    %c0_i32_0 = arith.constant 0 : i32
    %c0_i32_1 = arith.constant 0 : i32
    return %c0_i32, %c0_i32_0 : i32, i32
  }
  func.func @transform_4(%arg0: i32) -> (i32, i32) {
    %c0_i32 = arith.constant 0 : i32
    %c0_i32_0 = arith.constant 0 : i32
    %c0_i32_1 = arith.constant 0 : i32
    return %c0_i32, %c0_i32_0 : i32, i32
  }
  func.func @transform_5(%arg0: i32) -> (i32, i32) {
    %c0_i32 = arith.constant 0 : i32
    %c0_i32_0 = arith.constant 0 : i32
    %c0_i32_1 = arith.constant 0 : i32
    return %c0_i32, %c0_i32_0 : i32, i32
  }
  func.func @transform_6(%arg0: i32) -> (i32, i32) {
    %c0_i32 = arith.constant 0 : i32
    %c0_i32_0 = arith.constant 0 : i32
    %c0_i32_1 = arith.constant 0 : i32
    return %c0_i32, %c0_i32_0 : i32, i32
  }
  func.func @transform_7(%arg0: i32) -> (i32, i32) {
    %c0_i32 = arith.constant 0 : i32
    %c0_i32_0 = arith.constant 0 : i32
    %c0_i32_1 = arith.constant 0 : i32
    return %c0_i32, %c0_i32_0 : i32, i32
  }
  func.func @transform_8(%arg0: i32) -> (i32, i32) {
    %c0_i32 = arith.constant 0 : i32
    %c0_i32_0 = arith.constant 0 : i32
    %c0_i32_1 = arith.constant 0 : i32
    return %c0_i32, %c0_i32_0 : i32, i32
  }
  func.func @transform_9(%arg0: i32) -> (i32, i32) {
    %c0_i32 = arith.constant 0 : i32
    %c0_i32_0 = arith.constant 0 : i32
    return %arg0, %c0_i32 : i32, i32
  }
}

</mosaic_0001>

<llo_original>
// kernel: tpu_custom_call.1
$region0: #{tpu_custom_call.1}
  #allocation0 [shape = 'u32[]', space=smem, size = 0x4, offset = 0x4, fixed_abs, tag = 'smem constant byte address 0x4 - core index']
  #allocation1 [shape = 'u32[144,128]{1,0:T(1,128)}', space=vmem, size = 0x12000, scoped, tag = 'internal scratch']
  %s0 = inlined_call_operand.hbm [shape: bf16[8,16], index: 0, kind: input, shape index: {}]
  %s1 = inlined_call_operand.vmem [shape: bf16[16,32], index: 1, kind: input, shape index: {}]
  %s2 = inlined_call_operand.vmem [shape: f32[1,32], index: 2, kind: input, shape index: {}]
  %s3 = inlined_call_operand.vmem [shape: bf16[32,32], index: 3, kind: input, shape index: {}]
  %s4 = inlined_call_operand.vmem [shape: f32[1,32], index: 4, kind: input, shape index: {}]
  %s5 = inlined_call_operand.vmem [shape: bf16[32,16], index: 5, kind: input, shape index: {}]
  %s6 = inlined_call_operand.vmem [shape: f32[1,16], index: 6, kind: input, shape index: {}]
  %s7 = inlined_call_operand.vmem [shape: bf16[16,128], index: 7, kind: input, shape index: {}]
  %s8 = inlined_call_operand.vmem [shape: f32[1,128], index: 8, kind: input, shape index: {}]
  %s9 = inlined_call_operand.hbm [shape: f32[8,128], index: 9, kind: output, shape index: {}]
  %s10 = sld [smem:[#allocation0]]
  $region50: #{tpu_custom_call.1} parent=0
    _
  %s12 = ssub.s32 1, %s10
  %s13 = scalar_select 0, %s12, %s10
  $region1: #{tpu_custom_call.1} parent=0
    #allocation2 [shape = 'u8[2048]{0}', space=vmem, size = 0x800, scoped, tag = 'input window, operand 0, single buffered']
    #allocation3 [shape = 's32[1]{0}', space=sflag, size = 0x4, scoped, tag = 'scoped memory for tpu_custom_call.1']
    #allocation4 [shape = 's32[1]{0}', space=sflag, size = 0x4, scoped, tag = 'scoped memory for tpu_custom_call.1']
    #allocation5 [shape = 'u8[4096]{0}', space=vmem, size = 0x1000, scoped, tag = 'output window, operand 0, single buffered']
    %14 = vsyncpa [#allocation3], 0
    %15 = vsyncpa [#allocation4], 0
    // Predicated region
    $region2: #{tpu_custom_call.1} parent=1 // pred_check
      _
    $region3: #{tpu_custom_call.1} parent=1 // pred_check_branch
      %17 = sbr.rel (0) target = $region5
    $region4: #{tpu_custom_call.1} parent=1 // pred_region
      %s19 = ssub.s32 64, 64
      %20 = vsyncadd [#allocation3], %s19
      %s22 = sshll.u32 [#allocation2], 4
      %s23 = int_to_ptr.vmem [resolvable:$true] %s22
      %25 = dma.hbm_to_vmem [thread:$0]  %s0, 64, %s23, [#allocation3]
    $region5: #{tpu_custom_call.1} parent=1 // pred_fallthru
      _
    // Predicated region
    $region6: #{tpu_custom_call.1} parent=1 // pred_check
      _
    $region7: #{tpu_custom_call.1} parent=1 // pred_check_branch
      %27 = sbr.rel (0) target = $region9
    $region8: #{tpu_custom_call.1} parent=1 // pred_region
      _
    $region9: #{tpu_custom_call.1} parent=1 // pred_fallthru
      _
    // Predicated region
    $region10: #{tpu_custom_call.1} parent=1 // pred_check
      _
    $region11: #{tpu_custom_call.1} parent=1 // pred_check_branch
      %29 = sbr.rel (0) target = $region13
    $region12: #{tpu_custom_call.1} parent=1 // pred_region
      _
    $region13: #{tpu_custom_call.1} parent=1 // pred_fallthru
      _
    // Predicated region
    $region14: #{tpu_custom_call.1} parent=1 // pred_check
      _
    $region15: #{tpu_custom_call.1} parent=1 // pred_check_branch
      %31 = sbr.rel (0) target = $region17
    $region16: #{tpu_custom_call.1} parent=1 // pred_region
      _
    $region17: #{tpu_custom_call.1} parent=1 // pred_fallthru
      _
    // Predicated region
    $region18: #{tpu_custom_call.1} parent=1 // pred_check
      _
    $region19: #{tpu_custom_call.1} parent=1 // pred_check_branch
      %33 = sbr.rel (0) target = $region21
    $region20: #{tpu_custom_call.1} parent=1 // pred_region
      _
    $region21: #{tpu_custom_call.1} parent=1 // pred_fallthru
      _
    // Predicated region
    $region22: #{tpu_custom_call.1} parent=1 // pred_check
      _
    $region23: #{tpu_custom_call.1} parent=1 // pred_check_branch
      %35 = sbr.rel (0) target = $region25
    $region24: #{tpu_custom_call.1} parent=1 // pred_region
      _
    $region25: #{tpu_custom_call.1} parent=1 // pred_fallthru
      _
    // Predicated region
    $region26: #{tpu_custom_call.1} parent=1 // pred_check
      _
    $region27: #{tpu_custom_call.1} parent=1 // pred_check_branch
      %37 = sbr.rel (0) target = $region29
    $region28: #{tpu_custom_call.1} parent=1 // pred_region
      _
    $region29: #{tpu_custom_call.1} parent=1 // pred_fallthru
      _
    // Predicated region
    $region30: #{tpu_custom_call.1} parent=1 // pred_check
      _
    $region31: #{tpu_custom_call.1} parent=1 // pred_check_branch
      %39 = sbr.rel (0) target = $region33
    $region32: #{tpu_custom_call.1} parent=1 // pred_region
      _
    $region33: #{tpu_custom_call.1} parent=1 // pred_fallthru
      _
    // Predicated region
    $region34: #{tpu_custom_call.1} parent=1 // pred_check
      _
    $region35: #{tpu_custom_call.1} parent=1 // pred_check_branch
      %41 = sbr.rel (0) target = $region37
    $region36: #{tpu_custom_call.1} parent=1 // pred_region
      _
    $region37: #{tpu_custom_call.1} parent=1 // pred_fallthru
      _
    // Predicated region
    $region38: #{tpu_custom_call.1} parent=1 // pred_check
      _
    $region39: #{tpu_custom_call.1} parent=1 // pred_check_branch
      %43 = sbr.rel (0) target = $region41
    $region40: #{tpu_custom_call.1} parent=1 // pred_region
      %44 = dma.done [#allocation3], 64
    $region41: #{tpu_custom_call.1} parent=1 // pred_fallthru
      _
    %v46 = vld [vmem:[#allocation2] sm:$0xf]
    %v47 = vld [vmem:[%s1] sm:$0xf]
    %v48 = vld [vmem:[%s1 + $0x4] sm:$0xf]
    %v49 = vld [vmem:[%s2] sm:$0x1]
    %v51 = vlaneseq
    %v52 = vshrl.u32 %v51, 7
    %v53 = vsub.s32 0, %v52
    %v54 = vrot.slane %v49, %v53
    %v58 = vunpack.c.l.b16 %v47
    %v59 = vunpack.c.l.b16 %v48
    %v60 = vpack.c.b16 %v59, %v58
    %vm62 = vcmask 130048
    %v64 = vsel %vm62, %v46, 0
    %66 = vmatprep.subr.bf16.mxu0 0
    %67 = vmatpush1.bf16.msra.mxu0 %v60
    %68 = vmatprep.subr.bf16.mxu0 0
    %69 = vmatpush1.bf16.msra.mxu0 0
    %70 = vmatprep.subr.bf16.mxu0 0
    %71 = vmatpush1.bf16.msra.mxu0 0
    %72 = vmatprep.subr.bf16.mxu0 0
    %73 = vmatpush1.bf16.msra.mxu0 0
    %74 = vmatprep.subr.bf16.mxu0 0
    %75 = vmatpush1.bf16.msra.mxu0 0
    %76 = vmatprep.subr.bf16.mxu0 0
    %77 = vmatpush1.bf16.msra.mxu0 0
    %78 = vmatprep.subr.bf16.mxu0 0
    %79 = vmatpush1.bf16.msra.mxu0 0
    %80 = vmatprep.subr.bf16.mxu0 0
    %81 = vmatpush1.bf16.msra.mxu0 0
    %82 = vmatprep.subr.bf16.mxu0 0
    %83 = vmatpush1.bf16.msra.mxu0 0
    %84 = vmatprep.subr.bf16.mxu0 0
    %85 = vmatpush1.bf16.msra.mxu0 0
    %86 = vmatprep.subr.bf16.mxu0 0
    %87 = vmatpush1.bf16.msra.mxu0 0
    %88 = vmatprep.subr.bf16.mxu0 0
    %89 = vmatpush1.bf16.msra.mxu0 0
    %90 = vmatprep.subr.bf16.mxu0 0
    %91 = vmatpush1.bf16.msra.mxu0 0
    %92 = vmatprep.subr.bf16.mxu0 0
    %93 = vmatpush1.bf16.msra.mxu0 0
    %94 = vmatprep.subr.bf16.mxu0 0
    %95 = vmatpush1.bf16.msra.mxu0 0
    %96 = vmatprep.subr.bf16.mxu0 0
    %97 = vmatpush1.bf16.msra.mxu0 0
    %98 = vmatprep.mubr.bf16.mxu0 0
    %99 = vmatmul.mubr.bf16.gmra.mrb[0].mxu0 %v64
    %v100 = vpop.f32.mrb[0].mxu0
    %v101 = vadd.f32 %v54, %v100
    %v102 = vpop.f32.mrb[0].mxu0
    %v103 = vpop.f32.mrb[0].mxu0
    %v104 = vpop.f32.mrb[0].mxu0
    %105 = vdwg.mxu0
    %v106 = vmax.f32 %v101, 0.0
    %v107 = vpack.c.bf16 %v106, %v106
    %v108 = vld [vmem:[%s3] sm:$0xf]
    %v109 = vld [vmem:[%s3 + $0x4] sm:$0xf]
    %v110 = vld [vmem:[%s3 + $0x8] sm:$0xf]
    %v111 = vld [vmem:[%s3 + $0xc] sm:$0xf]
    %v112 = vld [vmem:[%s4] sm:$0x1]
    %v114 = vlaneseq
    %v115 = vshrl.u32 %v114, 7
    %v116 = vsub.s32 0, %v115
    %v117 = vrot.slane %v112, %v116
    %v123 = vunpack.c.l.b16 %v108
    %v124 = vunpack.c.l.b16 %v109
    %v125 = vunpack.c.l.b16 %v110
    %v126 = vunpack.c.l.b16 %v111
    %v127 = vpack.c.b16 %v124, %v123
    %v128 = vpack.c.b16 %v126, %v125
    %vm131 = vcmask 261120
    %v133 = vsel %vm131, %v107, 0
    %135 = vmatprep.subr.bf16.mxu0 0
    %136 = vmatpush1.bf16.msra.mxu0 %v127
    %137 = vmatprep.subr.bf16.mxu0 0
    %138 = vmatpush1.bf16.msra.mxu0 %v128
    %139 = vmatprep.subr.bf16.mxu0 0
    %140 = vmatpush1.bf16.msra.mxu0 0
    %141 = vmatprep.subr.bf16.mxu0 0
    %142 = vmatpush1.bf16.msra.mxu0 0
    %143 = vmatprep.subr.bf16.mxu0 0
    %144 = vmatpush1.bf16.msra.mxu0 0
    %145 = vmatprep.subr.bf16.mxu0 0
    %146 = vmatpush1.bf16.msra.mxu0 0
    %147 = vmatprep.subr.bf16.mxu0 0
    %148 = vmatpush1.bf16.msra.mxu0 0
    %149 = vmatprep.subr.bf16.mxu0 0
    %150 = vmatpush1.bf16.msra.mxu0 0
    %151 = vmatprep.subr.bf16.mxu0 0
    %152 = vmatpush1.bf16.msra.mxu0 0
    %153 = vmatprep.subr.bf16.mxu0 0
    %154 = vmatpush1.bf16.msra.mxu0 0
    %155 = vmatprep.subr.bf16.mxu0 0
    %156 = vmatpush1.bf16.msra.mxu0 0
    %157 = vmatprep.subr.bf16.mxu0 0
    %158 = vmatpush1.bf16.msra.mxu0 0
    %159 = vmatprep.subr.bf16.mxu0 0
    %160 = vmatpush1.bf16.msra.mxu0 0
    %161 = vmatprep.subr.bf16.mxu0 0
    %162 = vmatpush1.bf16.msra.mxu0 0
    %163 = vmatprep.subr.bf16.mxu0 0
    %164 = vmatpush1.bf16.msra.mxu0 0
    %165 = vmatprep.subr.bf16.mxu0 0
    %166 = vmatpush1.bf16.msra.mxu0 0
    %167 = vmatprep.mubr.bf16.mxu0 0
    %168 = vmatmul.mubr.bf16.gmra.mrb[0].mxu0 %v133
    %v169 = vpop.f32.mrb[0].mxu0
    %v170 = vadd.f32 %v117, %v169
    %v171 = vpop.f32.mrb[0].mxu0
    %v172 = vpop.f32.mrb[0].mxu0
    %v173 = vpop.f32.mrb[0].mxu0
    %174 = vdwg.mxu0
    %v175 = vmax.f32 %v170, 0.0
    %v176 = vpack.c.bf16 %v175, %v175
    %v177 = vld [vmem:[%s5] sm:$0xf]
    %v178 = vld [vmem:[%s5 + $0x4] sm:$0xf]
    %v179 = vld [vmem:[%s5 + $0x8] sm:$0xf]
    %v180 = vld [vmem:[%s5 + $0xc] sm:$0xf]
    %v181 = vld [vmem:[%s6] sm:$0x1]
    %v183 = vlaneseq
    %v184 = vshrl.u32 %v183, 7
    %v185 = vsub.s32 0, %v184
    %v186 = vrot.slane %v181, %v185
    %v192 = vunpack.c.l.b16 %v177
    %v193 = vunpack.c.l.b16 %v178
    %v194 = vunpack.c.l.b16 %v179
    %v195 = vunpack.c.l.b16 %v180
    %v196 = vpack.c.b16 %v193, %v192
    %v197 = vpack.c.b16 %v195, %v194
    %v201 = vsel %vm131, %v176, 0
    %203 = vmatprep.subr.bf16.mxu0 0
    %204 = vmatpush1.bf16.msra.mxu0 %v196
    %205 = vmatprep.subr.bf16.mxu0 0
    %206 = vmatpush1.bf16.msra.mxu0 %v197
    %207 = vmatprep.subr.bf16.mxu0 0
    %208 = vmatpush1.bf16.msra.mxu0 0
    %209 = vmatprep.subr.bf16.mxu0 0
    %210 = vmatpush1.bf16.msra.mxu0 0
    %211 = vmatprep.subr.bf16.mxu0 0
    %212 = vmatpush1.bf16.msra.mxu0 0
    %213 = vmatprep.subr.bf16.mxu0 0
    %214 = vmatpush1.bf16.msra.mxu0 0
    %215 = vmatprep.subr.bf16.mxu0 0
    %216 = vmatpush1.bf16.msra.mxu0 0
    %217 = vmatprep.subr.bf16.mxu0 0
    %218 = vmatpush1.bf16.msra.mxu0 0
    %219 = vmatprep.subr.bf16.mxu0 0
    %220 = vmatpush1.bf16.msra.mxu0 0
    %221 = vmatprep.subr.bf16.mxu0 0
    %222 = vmatpush1.bf16.msra.mxu0 0
    %223 = vmatprep.subr.bf16.mxu0 0
    %224 = vmatpush1.bf16.msra.mxu0 0
    %225 = vmatprep.subr.bf16.mxu0 0
    %226 = vmatpush1.bf16.msra.mxu0 0
    %227 = vmatprep.subr.bf16.mxu0 0
    %228 = vmatpush1.bf16.msra.mxu0 0
    %229 = vmatprep.subr.bf16.mxu0 0
    %230 = vmatpush1.bf16.msra.mxu0 0
    %231 = vmatprep.subr.bf16.mxu0 0
    %232 = vmatpush1.bf16.msra.mxu0 0
    %233 = vmatprep.subr.bf16.mxu0 0
    %234 = vmatpush1.bf16.msra.mxu0 0
    %235 = vmatprep.mubr.bf16.mxu0 0
    %236 = vmatmul.mubr.bf16.gmra.mrb[0].mxu0 %v201
    %v237 = vpop.f32.mrb[0].mxu0
    %v238 = vadd.f32 %v186, %v237
    %v239 = vpop.f32.mrb[0].mxu0
    %v240 = vpop.f32.mrb[0].mxu0
    %v241 = vpop.f32.mrb[0].mxu0
    %242 = vdwg.mxu0
    %v243 = vmax.f32 %v238, 0.0
    %v244 = vpack.c.bf16 %v243, %v243
    %v245 = vld [vmem:[%s7] sm:$0xf]
    %v246 = vld [vmem:[%s7 + $0x4] sm:$0xf]
    %v247 = vld [vmem:[%s8] sm:$0x1]
    %v249 = vlaneseq
    %v250 = vshrl.u32 %v249, 7
    %v251 = vsub.s32 0, %v250
    %v252 = vrot.slane %v247, %v251
    %v256 = vunpack.c.l.b16 %v245
    %v257 = vunpack.c.l.b16 %v246
    %v258 = vpack.c.b16 %v257, %v256
    %v261 = vsel %vm62, %v244, 0
    %263 = vmatprep.subr.bf16.mxu0 0
    %264 = vmatpush1.bf16.msra.mxu0 %v258
    %265 = vmatprep.subr.bf16.mxu0 0
    %266 = vmatpush1.bf16.msra.mxu0 0
    %267 = vmatprep.subr.bf16.mxu0 0
    %268 = vmatpush1.bf16.msra.mxu0 0
    %269 = vmatprep.subr.bf16.mxu0 0
    %270 = vmatpush1.bf16.msra.mxu0 0
    %271 = vmatprep.subr.bf16.mxu0 0
    %272 = vmatpush1.bf16.msra.mxu0 0
    %273 = vmatprep.subr.bf16.mxu0 0
    %274 = vmatpush1.bf16.msra.mxu0 0
    %275 = vmatprep.subr.bf16.mxu0 0
    %276 = vmatpush1.bf16.msra.mxu0 0
    %277 = vmatprep.subr.bf16.mxu0 0
    %278 = vmatpush1.bf16.msra.mxu0 0
    %279 = vmatprep.subr.bf16.mxu0 0
    %280 = vmatpush1.bf16.msra.mxu0 0
    %281 = vmatprep.subr.bf16.mxu0 0
    %282 = vmatpush1.bf16.msra.mxu0 0
    %283 = vmatprep.subr.bf16.mxu0 0
    %284 = vmatpush1.bf16.msra.mxu0 0
    %285 = vmatprep.subr.bf16.mxu0 0
    %286 = vmatpush1.bf16.msra.mxu0 0
    %287 = vmatprep.subr.bf16.mxu0 0
    %288 = vmatpush1.bf16.msra.mxu0 0
    %289 = vmatprep.subr.bf16.mxu0 0
    %290 = vmatpush1.bf16.msra.mxu0 0
    %291 = vmatprep.subr.bf16.mxu0 0
    %292 = vmatpush1.bf16.msra.mxu0 0
    %293 = vmatprep.subr.bf16.mxu0 0
    %294 = vmatpush1.bf16.msra.mxu0 0
    %295 = vmatprep.mubr.bf16.mxu0 0
    %296 = vmatmul.mubr.bf16.gmra.mrb[0].mxu0 %v261
    %v297 = vpop.f32.mrb[0].mxu0
    %v298 = vadd.f32 %v252, %v297
    %v299 = vpop.f32.mrb[0].mxu0
    %v300 = vpop.f32.mrb[0].mxu0
    %v301 = vpop.f32.mrb[0].mxu0
    %302 = vdwg.mxu0
    %303 = vmax.xlane.f32.xlu0 %v298
    %v304 = vpop.xlane.xlu0 %303
    %v305 = vsub.f32 %v298, %v304
    %v306 = vmul.f32 %v305, 1.442695
    %v307 = vpow.pop %v306
    %308 = vadd.xlane.f32.xlu0 %v307
    %v309 = vpop.xlane.xlu0 %308
    %v310 = vrcp.pop %v309
    %v311 = vmul.f32 %v307, %v310
    %312 = vst [vmem:[#allocation5] sm:$0xff] %v311
    // Predicated region
    $region42: #{tpu_custom_call.1} parent=1 // pred_check
      _
    $region43: #{tpu_custom_call.1} parent=1 // pred_check_branch
      %314 = sbr.rel (0) target = $region45
    $region44: #{tpu_custom_call.1} parent=1 // pred_region
      %s316 = ssub.s32 128, 128
      %317 = vsyncadd [#allocation4], %s316
      %s319 = sshll.u32 [#allocation5], 4
      %s320 = int_to_ptr.vmem [resolvable:$true] %s319
      %322 = dma.vmem_to_hbm [thread:$0]  %s320, 128, %s9, [#allocation4]
    $region45: #{tpu_custom_call.1} parent=1 // pred_fallthru
      _
    // Predicated region
    $region46: #{tpu_custom_call.1} parent=1 // pred_check
      _
    $region47: #{tpu_custom_call.1} parent=1 // pred_check_branch
      %324 = sbr.rel (0) target = $region49
    $region48: #{tpu_custom_call.1} parent=1 // pred_region
      %325 = dma.done [#allocation4], 128
    $region49: #{tpu_custom_call.1} parent=1 // pred_fallthru
      _
    %326 = vsyncpa [#allocation3], 1
    %327 = vsyncpa [#allocation4], 1

</llo_original>
